<compile_context>
chip_gen: v5e
topology: v5e:2x2
jax: 0.10.0
libtpu: 0.0.40
codegen_flags: <defaults>
</compile_context>

<pallas_src>
import jax
import jax.numpy as jnp
from jax.experimental import pallas as pl
from jax.experimental.pallas import tpu as pltpu


def _disturb_ce_kernel(pred_ref, tgt_ref, loss_ref):
    """pred block (tile_n, C), disturbed-target block (tile_n, 1) -> loss block (1, tile_n)."""
    n_rows, c = pred_ref.shape

    pred = pred_ref[...].astype(jnp.float32)                   # (tile_n, C)
    m = jnp.max(pred, axis=-1, keepdims=True)                  # (tile_n, 1)
    p_shift = pred - m                                          # reused for both terms (max cancels)
    sum_exp = jnp.sum(jnp.exp(p_shift), axis=-1)                # (tile_n,)

    col = jax.lax.broadcasted_iota(jnp.int32, (n_rows, c), 1)
    picked = jnp.sum(jnp.where(col == tgt_ref[...], p_shift, 0.0), axis=-1)   # (tile_n,)

    # Lane-dense row-vector store (no 1-lane-wide masked column stores).
    loss_ref[...] = (jnp.log(sum_exp) - picked).reshape(1, n_rows)


def _vmem_capacity_bytes():
    try:
        return int(pltpu.get_tpu_info().vmem_capacity_bytes)
    except Exception:
        return 64 * 1024 * 1024     # conservative fallback (v7x per-core physical VMEM)


def _round_up(x, m):
    return ((x + m - 1) // m) * m


def _pick_tile_n(n, c, tile_budget_bytes, want_two_tiles):
    # Rows per tile so the f32 working-set tile stays within budget; multiple of 16 so the
    # block is layout-legal for both f32 (8,128) and bf16 (16,128) minimum tiles.
    rows = max(16, ((tile_budget_bytes // (c * 4)) // 16) * 16)
    if want_two_tiles and n > 16:
        # v7x has 2 TensorCores: make sure the "parallel" grid axis has >= 2 steps.
        rows = min(rows, _round_up(pl.cdiv(n, 2), 16))
    if n <= rows:
        return n            # block == full dim -> always layout-legal
    return rows


def disturb_label_loss(pred, target, key, disturb_prob=0.1):
    """pred: (N, C) float32/bfloat16 logits, target: (N,) int labels -> scalar mean CE.

    NOTE: torch mutates `target` in place; JAX is functional, so only the loss is returned
    (the disturbed labels are an internal temporary).
    """
    n, c = pred.shape

    # ---- label disturbance (the torch.no_grad block), fused into one (N, 1) side input ----
    k_u, k_l = jax.random.split(key)
    u = jax.random.uniform(k_u, (n,), dtype=jnp.float32)                  # torch.rand(len(pred))
    rand_label = jax.random.randint(k_l, (n,), 0, c, dtype=jnp.int32)     # torch.randint(C, ...)
    disturbed = jnp.where(u < jnp.float32(disturb_prob),
                          rand_label, target.astype(jnp.int32)).reshape(n, 1)

    # ---- per-generation tiling / VMEM provisioning ----
    vmem_cap = _vmem_capacity_bytes()
    big_vmem = vmem_cap >= 96 * 1024 * 1024          # v5e / v6e (128 MiB physical)
    tile_budget = (8 if big_vmem else 4) * 1024 * 1024
    tile_n = _pick_tile_n(n, c, tile_budget, want_two_tiles=not big_vmem)
    num_tiles = pl.cdiv(n, tile_n)

    # Working set ~ double-buffered input + f32 upcast + p_shift/exp temps ~= 5x the f32 tile.
    tile_bytes_f32 = tile_n * c * 4
    vmem_limit = int(min(max(5 * tile_bytes_f32 + (2 << 20), 16 * 1024 * 1024),
                         (3 * vmem_cap) // 4))

    in_bytes = n * c * pred.dtype.itemsize + n * 4            # logits + disturbed targets
    out_bytes = num_tiles * tile_n * 4                        # per-row losses

    per_row = pl.pallas_call(
        _disturb_ce_kernel,
        out_shape=jax.ShapeDtypeStruct((num_tiles, tile_n), jnp.float32),
        grid=(num_tiles,),
        in_specs=[
            pl.BlockSpec((tile_n, c), lambda i: (i, 0)),      # logits (class dim whole)
            pl.BlockSpec((tile_n, 1), lambda i: (i, 0)),      # disturbed targets
        ],
        out_specs=pl.BlockSpec((1, tile_n), lambda i: (i, 0)),  # lane-dense loss row per tile
        compiler_params=pltpu.CompilerParams(
            dimension_semantics=("parallel",),
            vmem_limit_bytes=vmem_limit,
        ),
        cost_estimate=pl.CostEstimate(
            flops=5 * n * c,
            transcendentals=n * c,
            bytes_accessed=in_bytes + out_bytes,
        ),
    )(pred, disturbed)

    # Drop padded rows of the last partial tile, then the tiny mean reduction in plain JAX.
    return jnp.mean(per_row.reshape(-1)[:n])


if __name__ == "__main__":
    key = jax.random.PRNGKey(0)
    k_pred, k_tgt, k_disturb = jax.random.split(key, 3)

    N, C = 8, 128  # batch x num_classes
    pred = jax.random.normal(k_pred, (N, C), dtype=jnp.float32)
    target = jax.random.randint(k_tgt, (N,), 0, C, dtype=jnp.int32)

    loss = disturb_label_loss(pred, target, k_disturb, disturb_prob=0.1)
    jax.block_until_ready(loss)
    assert jnp.isfinite(loss)
    print("KERNEL_OK")
</pallas_src>

<mosaic_0001>
module attributes {stable_mosaic.version = 11 : i64} {
  func.func @_disturb_ce_kernel(%arg0: i32, %arg1: memref<8x128xf32, #tpu.memory_space<vmem>>, %arg2: memref<8x1xi32, #tpu.memory_space<vmem>>, %arg3: memref<1x8xf32, #tpu.memory_space<vmem>>) attributes {dimension_semantics = [#tpu.dimension_semantics<parallel>], iteration_bounds = array<i64: 1>, scalar_prefetch = 0 : i64, scratch_operands = 0 : i64, tpu.core_type = #tpu.core_type<tc>, window_params = [{transform_indices = @transform_0, window_bounds = array<i64: 8, 128>}, {transform_indices = @transform_1, window_bounds = array<i64: 8, 1>}, {transform_indices = @transform_2, window_bounds = array<i64: 1, 8>}]} {
    %c0 = arith.constant 0 : index
    %c0_0 = arith.constant 0 : index
    %0 = vector.load %arg1[%c0, %c0_0] : memref<8x128xf32, #tpu.memory_space<vmem>>, vector<8x128xf32>
    %cst = arith.constant dense<0xFF800000> : vector<8xf32>
    %1 = vector.multi_reduction <maximumf>, %0, %cst [1] : vector<8x128xf32> to vector<8xf32>
    %2 = vector.shape_cast %1 : vector<8xf32> to vector<8x1xf32>
    %3 = vector.broadcast %2 : vector<8x1xf32> to vector<8x128xf32>
    %4 = arith.subf %0, %3 : vector<8x128xf32>
    %5 = math.exp %4 : vector<8x128xf32>
    %cst_1 = arith.constant dense<0.000000e+00> : vector<8xf32>
    %6 = vector.multi_reduction <add>, %5, %cst_1 [1] : vector<8x128xf32> to vector<8xf32>
    %7 = tpu.iota {dimensions = array<i32: 1>} : vector<8x128xi32>
    %c0_2 = arith.constant 0 : index
    %c0_3 = arith.constant 0 : index
    %8 = vector.load %arg2[%c0_2, %c0_3] : memref<8x1xi32, #tpu.memory_space<vmem>>, vector<8x1xi32>
    %9 = vector.broadcast %8 : vector<8x1xi32> to vector<8x128xi32>
    %10 = arith.cmpi eq, %7, %9 : vector<8x128xi32>
    %cst_4 = arith.constant 0.000000e+00 : f32
    %11 = vector.broadcast %cst_4 : f32 to vector<8x128xf32>
    %12 = arith.select %10, %4, %11 : vector<8x128xi1>, vector<8x128xf32>
    %cst_5 = arith.constant dense<0.000000e+00> : vector<8xf32>
    %13 = vector.multi_reduction <add>, %12, %cst_5 [1] : vector<8x128xf32> to vector<8xf32>
    %14 = math.log %6 : vector<8xf32>
    %15 = arith.subf %14, %13 : vector<8xf32>
    %16 = vector.shape_cast %15 : vector<8xf32> to vector<1x8xf32>
    %c0_6 = arith.constant 0 : index
    %c0_7 = arith.constant 0 : index
    %17 = vector.load %arg3[%c0_6, %c0_7] : memref<1x8xf32, #tpu.memory_space<vmem>>, vector<1x8xf32>
    tpu.vector_store %arg3[%c0_6, %c0_7], %16 {strides = array<i32>} : memref<1x8xf32, #tpu.memory_space<vmem>>, vector<1x8xf32>,
    return
  }
  func.func @transform_0(%arg0: i32) -> (i32, i32) {
    %c0_i32 = arith.constant 0 : i32
    %c0_i32_0 = arith.constant 0 : i32
    return %arg0, %c0_i32 : i32, i32
  }
  func.func @transform_1(%arg0: i32) -> (i32, i32) {
    %c0_i32 = arith.constant 0 : i32
    %c0_i32_0 = arith.constant 0 : i32
    return %arg0, %c0_i32 : i32, i32
  }
  func.func @transform_2(%arg0: i32) -> (i32, i32) {
    %c0_i32 = arith.constant 0 : i32
    %c0_i32_0 = arith.constant 0 : i32
    return %arg0, %c0_i32 : i32, i32
  }
}

</mosaic_0001>

<llo_original>
// kernel: tpu_custom_call.1
$region0: #{tpu_custom_call.1}
  #allocation0 [shape = 'u32[]', space=smem, size = 0x4, offset = 0x4, fixed_abs, tag = 'smem constant byte address 0x4 - core index']
  #allocation1 [shape = 'u32[72,128]{1,0:T(1,128)}', space=vmem, size = 0x9000, scoped, tag = 'internal scratch']
  %s0 = inlined_call_operand.vmem [shape: f32[8,128], index: 0, kind: input, shape index: {}]
  %s1 = inlined_call_operand.vmem [shape: s32[8,1], index: 1, kind: input, shape index: {}]
  %s2 = inlined_call_operand.hbm [shape: f32[1,8], index: 2, kind: output, shape index: {}]
  %s3 = sld [smem:[#allocation0]]
  $region18: #{tpu_custom_call.1} parent=0
    _
  %s5 = ssub.s32 1, %s3
  %s6 = scalar_select 0, %s5, %s3
  $region1: #{tpu_custom_call.1} parent=0
    #allocation2 [shape = 'u8[512]{0}', space=vmem, size = 0x400, scoped, tag = 'output window, operand 0, single buffered']
    #allocation3 [shape = 's32[1]{0}', space=sflag, size = 0x4, scoped, tag = 'scoped memory for tpu_custom_call.1']
    %7 = vsyncpa [#allocation3], 0
    // Predicated region
    $region2: #{tpu_custom_call.1} parent=1 // pred_check
      _
    $region3: #{tpu_custom_call.1} parent=1 // pred_check_branch
      %9 = sbr.rel (0) target = $region5
    $region4: #{tpu_custom_call.1} parent=1 // pred_region
      _
    $region5: #{tpu_custom_call.1} parent=1 // pred_fallthru
      _
    // Predicated region
    $region6: #{tpu_custom_call.1} parent=1 // pred_check
      _
    $region7: #{tpu_custom_call.1} parent=1 // pred_check_branch
      %11 = sbr.rel (0) target = $region9
    $region8: #{tpu_custom_call.1} parent=1 // pred_region
      _
    $region9: #{tpu_custom_call.1} parent=1 // pred_fallthru
      _
    %v12 = vld [vmem:[%s0] sm:$0xff]
    %13 = vmax.xlane.f32.xlu0 %v12
    %v14 = vpop.xlane.xlu0 %13
    %v15 = vsub.f32 %v12, %v14
    %v16 = vmul.f32 %v15, 1.442695
    %v17 = vpow.pop %v16
    %18 = vadd.xlane.f32.xlu0 %v17
    %v19 = vpop.xlane.xlu0 %18
    %v20 = vlaneseq
    %v21 = vand.u32 %v20, 127
    %v22 = vld [vmem:[%s1] sm:$0xff]
    %23 = vset.pattern.permute.xlu0 0
    %24 = vperm.xlu0 %23, %v22
    %v25 = vpop.permute.xlu0 %24
    %vm26 = vcmp.eq.s32.totalorder %v21, %v25
    %v27 = vsel %vm26, %v15, 0.0
    %28 = vadd.xlane.f32.xlu0 %v27
    %v29 = vpop.xlane.xlu0 %28
    %v30 = vlog2.pop %v19
    %v31 = vmul.f32 %v30, 0.6931472
    %v32 = vsub.f32 %v31, %v29
    %v34 = vperm.slane %v32, %v21
    %vm36 = vcmask 57344
    %37 = vst.msk [vmem:[#allocation2] sm:$0x1] %vm36, %v34
    // Predicated region
    $region10: #{tpu_custom_call.1} parent=1 // pred_check
      _
    $region11: #{tpu_custom_call.1} parent=1 // pred_check_branch
      %39 = sbr.rel (0) target = $region13
    $region12: #{tpu_custom_call.1} parent=1 // pred_region
      %41 = vsyncadd [#allocation3], 0
      %s43 = sshll.u32 [#allocation2], 4
      %s44 = int_to_ptr.vmem [resolvable:$true] %s43
      %s45 = sshll.u32 %s2, 4
      %s46 = int_to_ptr.hbm [resolvable:$true] %s45
      %48 = dma.vmem_to_hbm [thread:$0]  %s44, 16, %s46, [#allocation3]
    $region13: #{tpu_custom_call.1} parent=1 // pred_fallthru
      _
    // Predicated region
    $region14: #{tpu_custom_call.1} parent=1 // pred_check
      _
    $region15: #{tpu_custom_call.1} parent=1 // pred_check_branch
      %50 = sbr.rel (0) target = $region17
    $region16: #{tpu_custom_call.1} parent=1 // pred_region
      %52 = dma.done [#allocation3], 16
    $region17: #{tpu_custom_call.1} parent=1 // pred_fallthru
      _
    %53 = vsyncpa [#allocation3], 1

</llo_original>
